<compile_context>
chip_gen: v6e
topology: v6e:2x2x1
jax: 0.10.0
libtpu: 0.0.40
codegen_flags: <defaults>
</compile_context>

<pallas_src>
import math
import jax
import jax.numpy as jnp
from jax.experimental import pallas as pl
from jax.experimental.pallas import tpu as pltpu


def _round_up(v, m):
    return (v + m - 1) // m * m


def _feature_regression_kernel(x_ref, wt_ref, b_ref, d_ref, o_ref):
    # o = x @ W.T - x * diag(W) + b
    x = x_ref[...]
    acc = jnp.dot(x, wt_ref[...], preferred_element_type=jnp.float32)
    acc = acc - x.astype(jnp.float32) * d_ref[...].astype(jnp.float32)
    o_ref[...] = (acc + b_ref[...].astype(jnp.float32)).astype(o_ref.dtype)


def feature_regression(x, w, b, *, tb_max=1024):
    """z_h = x @ (W * (1 - eye)).T + b   — Pallas TPU kernel."""
    batch, n = x.shape
    assert w.shape == (n, n)
    assert b.shape == (n,)

    itemsize = jnp.dtype(x.dtype).itemsize

    # Lane-dense feature axis: pad to a multiple of 128.
    n_pad = max(128, _round_up(n, 128))

    # Batch tile: largest multiple of 8 that (a) covers the batch, (b) stays
    # under tb_max, and (c) keeps double-buffered x/out tiles + resident W
    # within a conservative VMEM budget (safe on v7x's 64 MiB physical VMEM).
    vmem_budget = 40 * 1024 * 1024
    resident = n_pad * n_pad * itemsize + 2 * n_pad * 4  # W.T + bias + diag
    per_row = 2 * 2 * n_pad * itemsize                   # 2 streams x 2 buffers
    tb_cap = max(8, (vmem_budget - resident) // max(per_row, 1))
    tb = min(tb_max, _round_up(batch, 8), max(8, (tb_cap // 8) * 8))
    batch_pad = _round_up(batch, tb)

    # Wrapper-side (one-time) layout plumbing: transpose W, extract diagonal,
    # zero-pad everything to the padded shapes.
    wt = jnp.pad(w.T, ((0, n_pad - n), (0, n_pad - n)))              # (n_pad, n_pad)
    d2d = jnp.pad(jnp.diagonal(w).reshape(1, n), ((0, 0), (0, n_pad - n)))
    b2d = jnp.pad(b.reshape(1, n), ((0, 0), (0, n_pad - n)))
    x_p = jnp.pad(x, ((0, batch_pad - batch), (0, n_pad - n)))

    out = pl.pallas_call(
        _feature_regression_kernel,
        out_shape=jax.ShapeDtypeStruct((batch_pad, n_pad), x.dtype),
        grid=(batch_pad // tb,),
        in_specs=[
            pl.BlockSpec((tb, n_pad), lambda i: (i, 0)),      # x: streamed tiles
            pl.BlockSpec((n_pad, n_pad), lambda i: (0, 0)),   # W.T: resident
            pl.BlockSpec((1, n_pad), lambda i: (0, 0)),       # bias: resident
            pl.BlockSpec((1, n_pad), lambda i: (0, 0)),       # diag(W): resident
        ],
        out_specs=pl.BlockSpec((tb, n_pad), lambda i: (i, 0)),
        compiler_params=pltpu.CompilerParams(
            dimension_semantics=("parallel",),
            vmem_limit_bytes=48 * 1024 * 1024,
        ),
    )(x_p, wt, b2d, d2d)

    return out[:batch, :n]


def init_params(key, input_size, dtype=jnp.float32):
    """Match PyTorch reset_parameters: uniform(-stdv, stdv), stdv = 1/sqrt(N)."""
    stdv = 1.0 / math.sqrt(input_size)
    kw, kb = jax.random.split(key)
    W = jax.random.uniform(kw, (input_size, input_size), dtype,
                           minval=-stdv, maxval=stdv)
    b = jax.random.uniform(kb, (input_size,), dtype, minval=-stdv, maxval=stdv)
    return W, b


if __name__ == "__main__":
    key = jax.random.PRNGKey(0)
    kx, kp = jax.random.split(key)

    batch = 8
    input_size = 32   # feature dimension (input_size in the module)

    x = jax.random.normal(kx, (batch, input_size), jnp.float32)
    W, b = init_params(kp, input_size)

    z_h = feature_regression(x, W, b)
    z_h = jax.block_until_ready(z_h)

    # Reference check against plain JAX (same semantics as the PyTorch module).
    m = jnp.ones((input_size, input_size)) - jnp.eye(input_size)
    ref = x @ (W * m).T + b
    assert jnp.allclose(z_h, ref, atol=1e-5, rtol=1e-5), "mismatch vs reference"

    print("KERNEL_OK")
</pallas_src>

<mosaic_0001>
module attributes {stable_mosaic.version = 11 : i64} {
  func.func @_feature_regression_kernel(%arg0: i32, %arg1: memref<8x128xf32, #tpu.memory_space<vmem>>, %arg2: memref<128x128xf32, #tpu.memory_space<vmem>>, %arg3: memref<1x128xf32, #tpu.memory_space<vmem>>, %arg4: memref<1x128xf32, #tpu.memory_space<vmem>>, %arg5: memref<8x128xf32, #tpu.memory_space<vmem>>) attributes {dimension_semantics = [#tpu.dimension_semantics<parallel>], iteration_bounds = array<i64: 1>, scalar_prefetch = 0 : i64, scratch_operands = 0 : i64, tpu.core_type = #tpu.core_type<tc>, window_params = [{transform_indices = @transform_0, window_bounds = array<i64: 8, 128>}, {pipeline_mode = #tpu.pipeline_mode<synchronous>, transform_indices = @transform_1, window_bounds = array<i64: 128, 128>}, {pipeline_mode = #tpu.pipeline_mode<synchronous>, transform_indices = @transform_2, window_bounds = array<i64: 1, 128>}, {pipeline_mode = #tpu.pipeline_mode<synchronous>, transform_indices = @transform_3, window_bounds = array<i64: 1, 128>}, {transform_indices = @transform_4, window_bounds = array<i64: 8, 128>}]} {
    %c0 = arith.constant 0 : index
    %c0_0 = arith.constant 0 : index
    %0 = vector.load %arg1[%c0, %c0_0] : memref<8x128xf32, #tpu.memory_space<vmem>>, vector<8x128xf32>
    %c0_1 = arith.constant 0 : index
    %c0_2 = arith.constant 0 : index
    %1 = vector.load %arg2[%c0_1, %c0_2] : memref<128x128xf32, #tpu.memory_space<vmem>>, vector<128x128xf32>
    %cst = arith.constant dense<0.000000e+00> : vector<8x128xf32>
    %2 = tpu.matmul %0, %1, %cst {dimension_numbers = #tpu.dot_dimension_numbers<[1], [0], [0], [1], [0, 0, 1, 1], [], []>} : vector<8x128xf32>, vector<128x128xf32>, vector<8x128xf32> -> vector<8x128xf32>
    %c0_3 = arith.constant 0 : index
    %c0_4 = arith.constant 0 : index
    %3 = vector.load %arg4[%c0_3, %c0_4] : memref<1x128xf32, #tpu.memory_space<vmem>>, vector<1x128xf32>
    %4 = vector.broadcast %3 : vector<1x128xf32> to vector<8x128xf32>
    %5 = arith.mulf %0, %4 : vector<8x128xf32>
    %6 = arith.subf %2, %5 : vector<8x128xf32>
    %c0_5 = arith.constant 0 : index
    %c0_6 = arith.constant 0 : index
    %7 = vector.load %arg3[%c0_5, %c0_6] : memref<1x128xf32, #tpu.memory_space<vmem>>, vector<1x128xf32>
    %8 = vector.broadcast %7 : vector<1x128xf32> to vector<8x128xf32>
    %9 = arith.addf %6, %8 : vector<8x128xf32>
    %c0_7 = arith.constant 0 : index
    %c0_8 = arith.constant 0 : index
    %10 = vector.load %arg5[%c0_7, %c0_8] : memref<8x128xf32, #tpu.memory_space<vmem>>, vector<8x128xf32>
    tpu.vector_store %arg5[%c0_7, %c0_8], %9 {strides = array<i32>} : memref<8x128xf32, #tpu.memory_space<vmem>>, vector<8x128xf32>,
    return
  }
  func.func @transform_0(%arg0: i32) -> (i32, i32) {
    %c0_i32 = arith.constant 0 : i32
    %c0_i32_0 = arith.constant 0 : i32
    return %arg0, %c0_i32 : i32, i32
  }
  func.func @transform_1(%arg0: i32) -> (i32, i32) {
    %c0_i32 = arith.constant 0 : i32
    %c0_i32_0 = arith.constant 0 : i32
    %c0_i32_1 = arith.constant 0 : i32
    return %c0_i32, %c0_i32_0 : i32, i32
  }
  func.func @transform_2(%arg0: i32) -> (i32, i32) {
    %c0_i32 = arith.constant 0 : i32
    %c0_i32_0 = arith.constant 0 : i32
    %c0_i32_1 = arith.constant 0 : i32
    return %c0_i32, %c0_i32_0 : i32, i32
  }
  func.func @transform_3(%arg0: i32) -> (i32, i32) {
    %c0_i32 = arith.constant 0 : i32
    %c0_i32_0 = arith.constant 0 : i32
    %c0_i32_1 = arith.constant 0 : i32
    return %c0_i32, %c0_i32_0 : i32, i32
  }
  func.func @transform_4(%arg0: i32) -> (i32, i32) {
    %c0_i32 = arith.constant 0 : i32
    %c0_i32_0 = arith.constant 0 : i32
    return %arg0, %c0_i32 : i32, i32
  }
}

</mosaic_0001>

<llo_original>
// kernel: tpu_custom_call.1
$region0: #{tpu_custom_call.1}
  #allocation0 [shape = 'u32[]', space=smem, size = 0x4, offset = 0x4, fixed_abs, tag = 'smem constant byte address 0x4 - core index']
  #allocation1 [shape = 'u32[144,128]{1,0:T(1,128)}', space=vmem, size = 0x12000, scoped, tag = 'internal scratch']
  %s0 = inlined_call_operand.hbm [shape: f32[8,128], index: 0, kind: input, shape index: {}]
  %s1 = inlined_call_operand.hbm [shape: f32[128,128], index: 1, kind: input, shape index: {}]
  %s2 = inlined_call_operand.vmem [shape: f32[1,128], index: 2, kind: input, shape index: {}]
  %s3 = inlined_call_operand.vmem [shape: f32[1,128], index: 3, kind: input, shape index: {}]
  %s4 = inlined_call_operand.hbm [shape: f32[8,128], index: 4, kind: output, shape index: {}]
  %s5 = sld [smem:[#allocation0]]
  $region34: #{tpu_custom_call.1} parent=0
    _
  %s7 = ssub.s32 1, %s5
  %s8 = scalar_select 0, %s7, %s5
  $region1: #{tpu_custom_call.1} parent=0
    #allocation2 [shape = 'u8[4096]{0}', space=vmem, size = 0x1000, scoped, tag = 'input window, operand 0, single buffered']
    #allocation3 [shape = 's32[1]{0}', space=sflag, size = 0x4, scoped, tag = 'scoped memory for tpu_custom_call.1']
    #allocation4 [shape = 's32[1]{0}', space=sflag, size = 0x4, scoped, tag = 'scoped memory for tpu_custom_call.1']
    #allocation5 [shape = 'u8[65536]{0}', space=vmem, size = 0x10000, scoped, tag = 'input window, operand 1, single buffered']
    #allocation6 [shape = 's32[1]{0}', space=sflag, size = 0x4, scoped, tag = 'scoped memory for tpu_custom_call.1']
    #allocation7 [shape = 'u8[4096]{0}', space=vmem, size = 0x1000, scoped, tag = 'output window, operand 0, single buffered']
    %9 = vsyncpa [#allocation3], 0
    %10 = vsyncpa [#allocation6], 0
    %11 = vsyncpa [#allocation4], 0
    // Predicated region
    $region2: #{tpu_custom_call.1} parent=1 // pred_check
      _
    $region3: #{tpu_custom_call.1} parent=1 // pred_check_branch
      %13 = sbr.rel (0) target = $region5
    $region4: #{tpu_custom_call.1} parent=1 // pred_region
      %s15 = ssub.s32 128, 128
      %16 = vsyncadd [#allocation3], %s15
      %s18 = sshll.u32 [#allocation2], 4
      %s19 = int_to_ptr.vmem [resolvable:$true] %s18
      %21 = dma.hbm_to_vmem [thread:$0]  %s0, 128, %s19, [#allocation3]
    $region5: #{tpu_custom_call.1} parent=1 // pred_fallthru
      _
    // Predicated region
    $region6: #{tpu_custom_call.1} parent=1 // pred_check
      _
    $region7: #{tpu_custom_call.1} parent=1 // pred_check_branch
      %23 = sbr.rel (0) target = $region9
    $region8: #{tpu_custom_call.1} parent=1 // pred_region
      %s25 = ssub.s32 2048, 2048
      %26 = vsyncadd [#allocation6], %s25
      %s27 = sshll.u32 [#allocation5], 4
      %s28 = int_to_ptr.vmem [resolvable:$true] %s27
      %33 = dma.hbm_to_vmem [thread:$0]  %s1, 2048, %s28, [#allocation6], 128, 128, 8
    $region9: #{tpu_custom_call.1} parent=1 // pred_fallthru
      _
    // Predicated region
    $region10: #{tpu_custom_call.1} parent=1 // pred_check
      _
    $region11: #{tpu_custom_call.1} parent=1 // pred_check_branch
      %35 = sbr.rel (0) target = $region13
    $region12: #{tpu_custom_call.1} parent=1 // pred_region
      _
    $region13: #{tpu_custom_call.1} parent=1 // pred_fallthru
      _
    // Predicated region
    $region14: #{tpu_custom_call.1} parent=1 // pred_check
      _
    $region15: #{tpu_custom_call.1} parent=1 // pred_check_branch
      %37 = sbr.rel (0) target = $region17
    $region16: #{tpu_custom_call.1} parent=1 // pred_region
      _
    $region17: #{tpu_custom_call.1} parent=1 // pred_fallthru
      _
    // Predicated region
    $region18: #{tpu_custom_call.1} parent=1 // pred_check
      _
    $region19: #{tpu_custom_call.1} parent=1 // pred_check_branch
      %39 = sbr.rel (0) target = $region21
    $region20: #{tpu_custom_call.1} parent=1 // pred_region
      %40 = dma.done [#allocation3], 128
    $region21: #{tpu_custom_call.1} parent=1 // pred_fallthru
      _
    // Predicated region
    $region22: #{tpu_custom_call.1} parent=1 // pred_check
      _
    $region23: #{tpu_custom_call.1} parent=1 // pred_check_branch
      %42 = sbr.rel (0) target = $region25
    $region24: #{tpu_custom_call.1} parent=1 // pred_region
      %43 = dma.done [#allocation6], 2048
    $region25: #{tpu_custom_call.1} parent=1 // pred_fallthru
      _
    %v44 = vld [vmem:[#allocation2] sm:$0xff]
    %v45 = vld [vmem:[#allocation5] sm:$0xff]
    %v46 = vld [vmem:[#allocation5 + $0x8] sm:$0xff]
    %v47 = vld [vmem:[#allocation5 + $0x10] sm:$0xff]
    %v48 = vld [vmem:[#allocation5 + $0x18] sm:$0xff]
    %v49 = vld [vmem:[#allocation5 + $0x20] sm:$0xff]
    %v50 = vld [vmem:[#allocation5 + $0x28] sm:$0xff]
    %v51 = vld [vmem:[#allocation5 + $0x30] sm:$0xff]
    %v52 = vld [vmem:[#allocation5 + $0x38] sm:$0xff]
    %v53 = vld [vmem:[#allocation5 + $0x40] sm:$0xff]
    %v54 = vld [vmem:[#allocation5 + $0x48] sm:$0xff]
    %v55 = vld [vmem:[#allocation5 + $0x50] sm:$0xff]
    %v56 = vld [vmem:[#allocation5 + $0x58] sm:$0xff]
    %v57 = vld [vmem:[#allocation5 + $0x60] sm:$0xff]
    %v58 = vld [vmem:[#allocation5 + $0x68] sm:$0xff]
    %v59 = vld [vmem:[#allocation5 + $0x70] sm:$0xff]
    %v60 = vld [vmem:[#allocation5 + $0x78] sm:$0xff]
    %61 = vmatprep.subr.mxu0 0.0
    %62 = vmatpush1.msra.mxu0 %v60
    %63 = vmatprep.subr.mxu0 0.0
    %64 = vmatpush1.msra.mxu0 %v59
    %65 = vmatprep.subr.mxu0 0.0
    %66 = vmatpush1.msra.mxu0 %v58
    %67 = vmatprep.subr.mxu0 0.0
    %68 = vmatpush1.msra.mxu0 %v57
    %69 = vmatprep.subr.mxu0 0.0
    %70 = vmatpush1.msra.mxu0 %v56
    %71 = vmatprep.subr.mxu0 0.0
    %72 = vmatpush1.msra.mxu0 %v55
    %73 = vmatprep.subr.mxu0 0.0
    %74 = vmatpush1.msra.mxu0 %v54
    %75 = vmatprep.subr.mxu0 0.0
    %76 = vmatpush1.msra.mxu0 %v53
    %77 = vmatprep.subr.mxu0 0.0
    %78 = vmatpush1.msra.mxu0 %v52
    %79 = vmatprep.subr.mxu0 0.0
    %80 = vmatpush1.msra.mxu0 %v51
    %81 = vmatprep.subr.mxu0 0.0
    %82 = vmatpush1.msra.mxu0 %v50
    %83 = vmatprep.subr.mxu0 0.0
    %84 = vmatpush1.msra.mxu0 %v49
    %85 = vmatprep.subr.mxu0 0.0
    %86 = vmatpush1.msra.mxu0 %v48
    %87 = vmatprep.subr.mxu0 0.0
    %88 = vmatpush1.msra.mxu0 %v47
    %89 = vmatprep.subr.mxu0 0.0
    %90 = vmatpush1.msra.mxu0 %v46
    %91 = vmatprep.subr.mxu0 0.0
    %92 = vmatpush1.msra.mxu0 %v45
    %93 = vmatprep.subr.mxu0 0.0
    %94 = vmatpush2.msra.mxu0 0.0
    %95 = vmatprep.subr.mxu0 0.0
    %96 = vmatpush2.msra.mxu0 0.0
    %97 = vmatprep.subr.mxu0 0.0
    %98 = vmatpush2.msra.mxu0 0.0
    %99 = vmatprep.subr.mxu0 0.0
    %100 = vmatpush2.msra.mxu0 0.0
    %101 = vmatprep.subr.mxu0 0.0
    %102 = vmatpush2.msra.mxu0 0.0
    %103 = vmatprep.subr.mxu0 0.0
    %104 = vmatpush2.msra.mxu0 0.0
    %105 = vmatprep.subr.mxu0 0.0
    %106 = vmatpush2.msra.mxu0 0.0
    %107 = vmatprep.subr.mxu0 0.0
    %108 = vmatpush2.msra.mxu0 0.0
    %109 = vmatprep.subr.mxu0 0.0
    %110 = vmatpush2.msra.mxu0 0.0
    %111 = vmatprep.subr.mxu0 0.0
    %112 = vmatpush2.msra.mxu0 0.0
    %113 = vmatprep.subr.mxu0 0.0
    %114 = vmatpush2.msra.mxu0 0.0
    %115 = vmatprep.subr.mxu0 0.0
    %116 = vmatpush2.msra.mxu0 0.0
    %117 = vmatprep.subr.mxu0 0.0
    %118 = vmatpush2.msra.mxu0 0.0
    %119 = vmatprep.subr.mxu0 0.0
    %120 = vmatpush2.msra.mxu0 0.0
    %121 = vmatprep.subr.mxu0 0.0
    %122 = vmatpush2.msra.mxu0 0.0
    %123 = vmatprep.subr.mxu0 0.0
    %124 = vmatpush2.msra.mxu0 0.0
    %125 = vmatprep.mubr.f32.mxu0 0.0
    %126 = vmatmul.mubr.f32.gmra.mxu0 %v44
    %v127 = vpop.f32.mrf.mxu0
    %v128 = vadd.f32 0.0, %v127
    %v129 = vpop.f32.mrf.mxu0
    %130 = vdwg.mxu0
    %v131 = vld [vmem:[%s3] sm:$0x1]
    %v133 = vlaneseq
    %v134 = vshrl.u32 %v133, 7
    %v135 = vsub.s32 0, %v134
    %v136 = vrot.slane %v131, %v135
    %v138 = vmul.f32 %v44, %v136
    %v139 = vsub.f32 %v128, %v138
    %v140 = vld [vmem:[%s2] sm:$0x1]
    %v142 = vlaneseq
    %v143 = vshrl.u32 %v142, 7
    %v144 = vsub.s32 0, %v143
    %v145 = vrot.slane %v140, %v144
    %v147 = vadd.f32 %v139, %v145
    %148 = vst [vmem:[#allocation7] sm:$0xff] %v147
    // Predicated region
    $region26: #{tpu_custom_call.1} parent=1 // pred_check
      _
    $region27: #{tpu_custom_call.1} parent=1 // pred_check_branch
      %150 = sbr.rel (0) target = $region29
    $region28: #{tpu_custom_call.1} parent=1 // pred_region
      %s152 = ssub.s32 128, 128
      %153 = vsyncadd [#allocation4], %s152
      %s155 = sshll.u32 [#allocation7], 4
      %s156 = int_to_ptr.vmem [resolvable:$true] %s155
      %158 = dma.vmem_to_hbm [thread:$0]  %s156, 128, %s4, [#allocation4]
    $region29: #{tpu_custom_call.1} parent=1 // pred_fallthru
      _
    // Predicated region
    $region30: #{tpu_custom_call.1} parent=1 // pred_check
      _
    $region31: #{tpu_custom_call.1} parent=1 // pred_check_branch
      %160 = sbr.rel (0) target = $region33
    $region32: #{tpu_custom_call.1} parent=1 // pred_region
      %161 = dma.done [#allocation4], 128
    $region33: #{tpu_custom_call.1} parent=1 // pred_fallthru
      _
    %162 = vsyncpa [#allocation3], 1
    %163 = vsyncpa [#allocation6], 1
    %164 = vsyncpa [#allocation4], 1

</llo_original>
